<compile_context>
chip_gen: v6e
topology: v6e:2x2x1
jax: 0.10.0
libtpu: 0.0.40
codegen_flags: <defaults>
</compile_context>

<pallas_src>
from functools import partial

import jax
import jax.numpy as jnp
from jax.experimental import pallas as pl
from jax.experimental.pallas import tpu as pltpu


def predict_mlp_kernel(seed_ref, smi_ref, fas_ref,
                       w1a_ref, w1b_ref, b1_ref,
                       w2_ref, b2_ref, w3_ref, b3_ref,
                       o_ref, *, drop_rate):
    tile_b = smi_ref.shape[0]
    h1 = w1a_ref.shape[0]
    h2 = w2_ref.shape[0]
    f32 = jnp.float32

    use_dropout = drop_rate > 0.0
    if use_dropout:
        # Per-tile seed so different batch tiles get independent masks.
        pltpu.prng_seed(seed_ref[0], pl.program_id(0))
        # Guard against uint32 overflow at drop_rate == 1.0.
        thresh = jnp.uint32(min(int(drop_rate * 4294967296.0), 4294967295))

    # Contract the feature axes; batch lands on the lane axis of the result.
    dims = (((1,), (1,)), ((), ()))

    # fc1 (+relu +dropout): (h1, TILE_B).  Concat is fused — W1 was split along
    # its input axis in the wrapper, so smi/fas are consumed directly.
    h = (jax.lax.dot_general(w1a_ref[...], smi_ref[...], dims,
                             preferred_element_type=f32)
         + jax.lax.dot_general(w1b_ref[...], fas_ref[...], dims,
                               preferred_element_type=f32)
         + b1_ref[...])
    h = jnp.maximum(h, 0.0)
    if use_dropout:
        bits = pltpu.prng_random_bits((h1, tile_b))
        if bits.dtype != jnp.uint32:
            bits = pltpu.bitcast(bits, jnp.uint32)
        # 1/(1-p) is folded into W2 in the wrapper.
        h = jnp.where(bits >= thresh, h, 0.0)

    # fc2 (+relu +dropout): (h2, TILE_B).  W2 is PyTorch [out, in] -> plain dot.
    h = jnp.dot(w2_ref[...], h.astype(w2_ref.dtype),
                preferred_element_type=f32) + b2_ref[...]
    h = jnp.maximum(h, 0.0)
    if use_dropout:
        bits2 = pltpu.prng_random_bits((h2, tile_b))
        if bits2.dtype != jnp.uint32:
            bits2 = pltpu.bitcast(bits2, jnp.uint32)
        # 1/(1-p) is folded into W3 in the wrapper.
        h = jnp.where(bits2 >= thresh, h, 0.0)

    # fc3 + sigmoid, written directly as a lane-dense (1, TILE_B) slab.
    logits = jnp.dot(w3_ref[...], h.astype(w3_ref.dtype),
                     preferred_element_type=f32) + b3_ref[...]
    o_ref[...] = jax.nn.sigmoid(logits).astype(o_ref.dtype)


def _round_up(x, m):
    return ((x + m - 1) // m) * m


def predict_forward(smi_common, fas_common, params, *, drop_rate=0.2, seed=0,
                    compute_dtype=jnp.float32):
    """Pallas equivalent of Predict.forward.

    params = (w1, b1, w2, b2, w3, b3) in PyTorch layout ([out, in] / [out]).
    compute_dtype=jnp.bfloat16 halves DMA bytes on v5e/v6e/v7x (f32 accumulate).
    """
    bs, hd = smi_common.shape
    assert fas_common.shape == (bs, hd)
    w1, b1, w2, b2, w3, b3 = params
    h1, in_dim = w1.shape
    h2 = w2.shape[0]
    out_dim = w3.shape[0]
    assert in_dim == 2 * hd
    assert out_dim == 1, "module reshapes the output to (bs,), so out_dim must be 1"

    # One-time param prep (tiny): split W1 so the concat fuses into the kernel,
    # fold the inverted-dropout scale into W2/W3, keep PyTorch [out, in] layout
    # (batch-on-lanes needs no transposes), biases as (out, 1) columns.
    w1a = w1[:, :hd]
    w1b = w1[:, hd:]
    if drop_rate > 0.0:
        scale = 1.0 / (1.0 - float(drop_rate))
        w2 = w2 * scale
        w3 = w3 * scale
    cd = compute_dtype
    smi = smi_common.astype(cd)
    fas = fas_common.astype(cd)
    w1a = w1a.astype(cd)
    w1b = w1b.astype(cd)
    w2c = w2.astype(cd)
    w3c = w3.astype(cd)
    b1r = b1.reshape(h1, 1).astype(jnp.float32)
    b2r = b2.reshape(h2, 1).astype(jnp.float32)
    b3r = b3.reshape(1, 1).astype(jnp.float32)

    # Batch tiling: per-grid-step overhead dominates at these feature sizes, so
    # use one block for tiny batches, two blocks (-> both v7x TCs) for mid-size
    # batches, and large lane-/sublane-aligned 1024-row tiles otherwise.
    if bs < 256:
        tile_b = max(8, _round_up(bs, 8))
    elif bs <= 2048:
        tile_b = _round_up((bs + 1) // 2, 128)
    else:
        tile_b = 1024
    padded = _round_up(bs, tile_b)
    if padded != bs:
        pad = padded - bs
        smi = jnp.pad(smi, ((0, pad), (0, 0)))
        fas = jnp.pad(fas, ((0, pad), (0, 0)))
    grid = (padded // tile_b,)

    out = pl.pallas_call(
        partial(predict_mlp_kernel, drop_rate=float(drop_rate)),
        out_shape=jax.ShapeDtypeStruct((1, padded), jnp.float32),
        grid_spec=pltpu.PrefetchScalarGridSpec(
            num_scalar_prefetch=1,                                    # dropout seed (SMEM)
            grid=grid,
            in_specs=[
                pl.BlockSpec((tile_b, hd), lambda i, s: (i, 0)),      # smi tile
                pl.BlockSpec((tile_b, hd), lambda i, s: (i, 0)),      # fas tile
                pl.BlockSpec((h1, hd), lambda i, s: (0, 0)),          # W1a (resident)
                pl.BlockSpec((h1, hd), lambda i, s: (0, 0)),          # W1b (resident)
                pl.BlockSpec((h1, 1), lambda i, s: (0, 0)),           # b1
                pl.BlockSpec((h2, h1), lambda i, s: (0, 0)),          # W2 (resident)
                pl.BlockSpec((h2, 1), lambda i, s: (0, 0)),           # b2
                pl.BlockSpec((1, h2), lambda i, s: (0, 0)),           # W3
                pl.BlockSpec((1, 1), lambda i, s: (0, 0)),            # b3
            ],
            out_specs=pl.BlockSpec((1, tile_b), lambda i, s: (0, i)), # lane-dense
        ),
        compiler_params=pltpu.CompilerParams(
            dimension_semantics=("parallel",),
            vmem_limit_bytes=48 * 1024 * 1024,    # headroom for 1024-row tiles,
        ),                                        # still < v7x 64 MiB physical
    )(jnp.asarray([seed], jnp.int32), smi, fas,
      w1a, w1b, b1r, w2c, b2r, w3c, b3r)

    return out.reshape(padded)[:bs]


def init_mlp_params(key, hidden_dim, out_dim):
    """xavier_normal_ weights in PyTorch [out, in] layout, zero biases."""
    def xavier_normal(k, out_n, in_n):
        std = (2.0 / (in_n + out_n)) ** 0.5
        return jax.random.normal(k, (out_n, in_n), jnp.float32) * std

    k1, k2, k3 = jax.random.split(key, 3)
    half, quarter = hidden_dim // 2, hidden_dim // 4
    w1 = xavier_normal(k1, half, hidden_dim)
    b1 = jnp.zeros((half,), jnp.float32)
    w2 = xavier_normal(k2, quarter, half)
    b2 = jnp.zeros((quarter,), jnp.float32)
    w3 = xavier_normal(k3, out_dim, quarter)
    b3 = jnp.zeros((out_dim,), jnp.float32)
    return (w1, b1, w2, b2, w3, b3)


def predict_reference(smi, fas, params):
    """Pure-JAX reference (drop_rate = 0, deterministic path)."""
    w1, b1, w2, b2, w3, b3 = params
    x = jnp.concatenate([smi, fas], axis=1)
    hi = jax.lax.Precision.HIGHEST
    h = jax.nn.relu(jnp.dot(x, w1.T, precision=hi) + b1)
    h = jax.nn.relu(jnp.dot(h, w2.T, precision=hi) + b2)
    return jax.nn.sigmoid(jnp.dot(h, w3.T, precision=hi) + b3).reshape(x.shape[0])


if __name__ == "__main__":
    hidden_dim = 16          # Predict(hidden_dim) -> MLP hidden of 2*16 = 32
    batch = 256              # exercises the two-tile batch grid (2 x 128 rows)

    key = jax.random.PRNGKey(0)
    k_smi, k_fas, k_p = jax.random.split(key, 3)
    smi = jax.random.normal(k_smi, (batch, hidden_dim), jnp.float32)
    fas = jax.random.normal(k_fas, (batch, hidden_dim), jnp.float32)
    params = init_mlp_params(k_p, 2 * hidden_dim, 1)

    # Deterministic check (drop_rate=0): kernel vs pure-JAX reference.
    out = predict_forward(smi, fas, params, drop_rate=0.0, seed=0)
    out = jax.block_until_ready(out)
    ref = predict_reference(smi, fas, params)
    assert out.shape == (batch,)
    assert jnp.allclose(out, ref, atol=1e-4, rtol=1e-4)

    # Ragged tiny batch: exercises the single-block + pad path.
    out_small = predict_forward(smi[:10], fas[:10], params, drop_rate=0.0, seed=0)
    out_small = jax.block_until_ready(out_small)
    assert out_small.shape == (10,)
    assert jnp.allclose(out_small, ref[:10], atol=1e-4, rtol=1e-4)

    # Training-mode dropout (module default p=0.2) uses the TPU hardware PRNG,
    # which only lowers on a real TPU backend — exercise it only there.
    if jax.default_backend() == "tpu":
        out_drop = predict_forward(smi, fas, params, drop_rate=0.2, seed=1234)
        out_drop = jax.block_until_ready(out_drop)
        assert out_drop.shape == (batch,)
        assert bool(jnp.all((out_drop >= 0.0) & (out_drop <= 1.0)))

    print("KERNEL_OK")
</pallas_src>

<mosaic_0001>
module attributes {stable_mosaic.version = 11 : i64} {
  func.func @predict_mlp_kernel(%arg0: i32, %arg1: memref<1xi32, #tpu.memory_space<smem>>, %arg2: memref<128x16xf32, #tpu.memory_space<vmem>>, %arg3: memref<128x16xf32, #tpu.memory_space<vmem>>, %arg4: memref<16x16xf32, #tpu.memory_space<vmem>>, %arg5: memref<16x16xf32, #tpu.memory_space<vmem>>, %arg6: memref<16x1xf32, #tpu.memory_space<vmem>>, %arg7: memref<8x16xf32, #tpu.memory_space<vmem>>, %arg8: memref<8x1xf32, #tpu.memory_space<vmem>>, %arg9: memref<1x8xf32, #tpu.memory_space<vmem>>, %arg10: memref<1x1xf32, #tpu.memory_space<vmem>>, %arg11: memref<1x128xf32, #tpu.memory_space<vmem>>) attributes {dimension_semantics = [#tpu.dimension_semantics<parallel>], iteration_bounds = array<i64: 2>, scalar_prefetch = 1 : i64, scratch_operands = 0 : i64, tpu.core_type = #tpu.core_type<tc>, window_params = [{transform_indices = @transform_0, window_bounds = array<i64: 128, 16>}, {transform_indices = @transform_1, window_bounds = array<i64: 128, 16>}, {pipeline_mode = #tpu.pipeline_mode<synchronous>, transform_indices = @transform_2, window_bounds = array<i64: 16, 16>}, {pipeline_mode = #tpu.pipeline_mode<synchronous>, transform_indices = @transform_3, window_bounds = array<i64: 16, 16>}, {pipeline_mode = #tpu.pipeline_mode<synchronous>, transform_indices = @transform_4, window_bounds = array<i64: 16, 1>}, {pipeline_mode = #tpu.pipeline_mode<synchronous>, transform_indices = @transform_5, window_bounds = array<i64: 8, 16>}, {pipeline_mode = #tpu.pipeline_mode<synchronous>, transform_indices = @transform_6, window_bounds = array<i64: 8, 1>}, {pipeline_mode = #tpu.pipeline_mode<synchronous>, transform_indices = @transform_7, window_bounds = array<i64: 1, 8>}, {pipeline_mode = #tpu.pipeline_mode<synchronous>, transform_indices = @transform_8, window_bounds = array<i64: 1, 1>}, {transform_indices = @transform_9, window_bounds = array<i64: 1, 128>}]} {
    %c0 = arith.constant 0 : index
    %c0_0 = arith.constant 0 : index
    %0 = vector.load %arg4[%c0, %c0_0] : memref<16x16xf32, #tpu.memory_space<vmem>>, vector<16x16xf32>
    %c0_1 = arith.constant 0 : index
    %c0_2 = arith.constant 0 : index
    %1 = vector.load %arg2[%c0_1, %c0_2] : memref<128x16xf32, #tpu.memory_space<vmem>>, vector<128x16xf32>
    %cst = arith.constant dense<0.000000e+00> : vector<16x128xf32>
    %2 = tpu.matmul %0, %1, %cst {dimension_numbers = #tpu.dot_dimension_numbers<[1], [1], [0], [0], [0, 0, 1, 0], [], []>} : vector<16x16xf32>, vector<128x16xf32>, vector<16x128xf32> -> vector<16x128xf32>
    %c0_3 = arith.constant 0 : index
    %c0_4 = arith.constant 0 : index
    %3 = vector.load %arg5[%c0_3, %c0_4] : memref<16x16xf32, #tpu.memory_space<vmem>>, vector<16x16xf32>
    %c0_5 = arith.constant 0 : index
    %c0_6 = arith.constant 0 : index
    %4 = vector.load %arg3[%c0_5, %c0_6] : memref<128x16xf32, #tpu.memory_space<vmem>>, vector<128x16xf32>
    %cst_7 = arith.constant dense<0.000000e+00> : vector<16x128xf32>
    %5 = tpu.matmul %3, %4, %cst_7 {dimension_numbers = #tpu.dot_dimension_numbers<[1], [1], [0], [0], [0, 0, 1, 0], [], []>} : vector<16x16xf32>, vector<128x16xf32>, vector<16x128xf32> -> vector<16x128xf32>
    %6 = arith.addf %2, %5 : vector<16x128xf32>
    %c0_8 = arith.constant 0 : index
    %c0_9 = arith.constant 0 : index
    %7 = vector.load %arg6[%c0_8, %c0_9] : memref<16x1xf32, #tpu.memory_space<vmem>>, vector<16x1xf32>
    %8 = vector.broadcast %7 : vector<16x1xf32> to vector<16x128xf32>
    %9 = arith.addf %6, %8 : vector<16x128xf32>
    %cst_10 = arith.constant 0.000000e+00 : f32
    %10 = vector.broadcast %cst_10 : f32 to vector<16x128xf32>
    %11 = arith.maximumf %9, %10 : vector<16x128xf32>
    %c0_11 = arith.constant 0 : index
    %c0_12 = arith.constant 0 : index
    %12 = vector.load %arg7[%c0_11, %c0_12] : memref<8x16xf32, #tpu.memory_space<vmem>>, vector<8x16xf32>
    %cst_13 = arith.constant dense<0.000000e+00> : vector<8x128xf32>
    %13 = tpu.matmul %12, %11, %cst_13 {dimension_numbers = #tpu.dot_dimension_numbers<[1], [0], [0], [1], [0, 0, 1, 1], [], []>} : vector<8x16xf32>, vector<16x128xf32>, vector<8x128xf32> -> vector<8x128xf32>
    %c0_14 = arith.constant 0 : index
    %c0_15 = arith.constant 0 : index
    %14 = vector.load %arg8[%c0_14, %c0_15] : memref<8x1xf32, #tpu.memory_space<vmem>>, vector<8x1xf32>
    %15 = vector.broadcast %14 : vector<8x1xf32> to vector<8x128xf32>
    %16 = arith.addf %13, %15 : vector<8x128xf32>
    %cst_16 = arith.constant 0.000000e+00 : f32
    %17 = vector.broadcast %cst_16 : f32 to vector<8x128xf32>
    %18 = arith.maximumf %16, %17 : vector<8x128xf32>
    %c0_17 = arith.constant 0 : index
    %c0_18 = arith.constant 0 : index
    %19 = vector.load %arg9[%c0_17, %c0_18] : memref<1x8xf32, #tpu.memory_space<vmem>>, vector<1x8xf32>
    %cst_19 = arith.constant dense<0.000000e+00> : vector<1x128xf32>
    %20 = tpu.matmul %19, %18, %cst_19 {dimension_numbers = #tpu.dot_dimension_numbers<[1], [0], [0], [1], [0, 0, 1, 1], [], []>} : vector<1x8xf32>, vector<8x128xf32>, vector<1x128xf32> -> vector<1x128xf32>
    %c0_20 = arith.constant 0 : index
    %c0_21 = arith.constant 0 : index
    %21 = vector.load %arg10[%c0_20, %c0_21] : memref<1x1xf32, #tpu.memory_space<vmem>>, vector<1x1xf32>
    %22 = vector.broadcast %21 : vector<1x1xf32> to vector<1x128xf32>
    %23 = arith.addf %20, %22 : vector<1x128xf32>
    %24 = arith.negf %23 : vector<1x128xf32>
    %25 = math.exp %24 : vector<1x128xf32>
    %cst_22 = arith.constant 1.000000e+00 : f32
    %26 = vector.broadcast %cst_22 : f32 to vector<1x128xf32>
    %27 = arith.addf %26, %25 : vector<1x128xf32>
    %28 = arith.divf %26, %27 : vector<1x128xf32>
    %c0_23 = arith.constant 0 : index
    %c0_24 = arith.constant 0 : index
    %29 = vector.load %arg11[%c0_23, %c0_24] : memref<1x128xf32, #tpu.memory_space<vmem>>, vector<1x128xf32>
    tpu.vector_store %arg11[%c0_23, %c0_24], %28 {strides = array<i32>} : memref<1x128xf32, #tpu.memory_space<vmem>>, vector<1x128xf32>,
    return
  }
  func.func @transform_0(%arg0: i32, %arg1: memref<1xi32, #tpu.memory_space<smem>>) -> (i32, i32) {
    %c0_i32 = arith.constant 0 : i32
    %c0_i32_0 = arith.constant 0 : i32
    return %arg0, %c0_i32 : i32, i32
  }
  func.func @transform_1(%arg0: i32, %arg1: memref<1xi32, #tpu.memory_space<smem>>) -> (i32, i32) {
    %c0_i32 = arith.constant 0 : i32
    %c0_i32_0 = arith.constant 0 : i32
    return %arg0, %c0_i32 : i32, i32
  }
  func.func @transform_2(%arg0: i32, %arg1: memref<1xi32, #tpu.memory_space<smem>>) -> (i32, i32) {
    %c0_i32 = arith.constant 0 : i32
    %c0_i32_0 = arith.constant 0 : i32
    %c0_i32_1 = arith.constant 0 : i32
    return %c0_i32, %c0_i32_0 : i32, i32
  }
  func.func @transform_3(%arg0: i32, %arg1: memref<1xi32, #tpu.memory_space<smem>>) -> (i32, i32) {
    %c0_i32 = arith.constant 0 : i32
    %c0_i32_0 = arith.constant 0 : i32
    %c0_i32_1 = arith.constant 0 : i32
    return %c0_i32, %c0_i32_0 : i32, i32
  }
  func.func @transform_4(%arg0: i32, %arg1: memref<1xi32, #tpu.memory_space<smem>>) -> (i32, i32) {
    %c0_i32 = arith.constant 0 : i32
    %c0_i32_0 = arith.constant 0 : i32
    %c0_i32_1 = arith.constant 0 : i32
    return %c0_i32, %c0_i32_0 : i32, i32
  }
  func.func @transform_5(%arg0: i32, %arg1: memref<1xi32, #tpu.memory_space<smem>>) -> (i32, i32) {
    %c0_i32 = arith.constant 0 : i32
    %c0_i32_0 = arith.constant 0 : i32
    %c0_i32_1 = arith.constant 0 : i32
    return %c0_i32, %c0_i32_0 : i32, i32
  }
  func.func @transform_6(%arg0: i32, %arg1: memref<1xi32, #tpu.memory_space<smem>>) -> (i32, i32) {
    %c0_i32 = arith.constant 0 : i32
    %c0_i32_0 = arith.constant 0 : i32
    %c0_i32_1 = arith.constant 0 : i32
    return %c0_i32, %c0_i32_0 : i32, i32
  }
  func.func @transform_7(%arg0: i32, %arg1: memref<1xi32, #tpu.memory_space<smem>>) -> (i32, i32) {
    %c0_i32 = arith.constant 0 : i32
    %c0_i32_0 = arith.constant 0 : i32
    %c0_i32_1 = arith.constant 0 : i32
    return %c0_i32, %c0_i32_0 : i32, i32
  }
  func.func @transform_8(%arg0: i32, %arg1: memref<1xi32, #tpu.memory_space<smem>>) -> (i32, i32) {
    %c0_i32 = arith.constant 0 : i32
    %c0_i32_0 = arith.constant 0 : i32
    %c0_i32_1 = arith.constant 0 : i32
    return %c0_i32, %c0_i32_0 : i32, i32
  }
  func.func @transform_9(%arg0: i32, %arg1: memref<1xi32, #tpu.memory_space<smem>>) -> (i32, i32) {
    %c0_i32 = arith.constant 0 : i32
    %c0_i32_0 = arith.constant 0 : i32
    return %c0_i32, %arg0 : i32, i32
  }
}

</mosaic_0001>

<llo_original>
// kernel: tpu_custom_call.1
$region0: #{tpu_custom_call.1}
  #allocation0 [shape = 'u32[]', space=smem, size = 0x4, offset = 0x4, fixed_abs, tag = 'smem constant byte address 0x4 - core index']
  #allocation1 [shape = 'u32[144,128]{1,0:T(1,128)}', space=vmem, size = 0x12000, scoped, tag = 'internal scratch']
  #allocation2 [shape = 's32[1]{0}', space=sflag, size = 0x4, scoped, tag = 'scoped memory for tpu_custom_call.1']
  #allocation3 [shape = 's32[1]{0:T(128)S(6)}', space=smem, size = 0x200, scoped, tag = 'prefetched SMEM operand 0']
  #allocation4 [shape = 'f32[1,1]{1,0:T(1,128)S(1)}', space=vmem, size = 0x200, scoped, tag = 'scoped memory for tpu_custom_call.1']
  %s0 = inlined_call_operand.<no memory space> [shape: s32[1], index: 0, kind: input, shape index: {}]
  %s1 = inlined_call_operand.vmem [shape: f32[256,16], index: 1, kind: input, shape index: {}]
  %s2 = inlined_call_operand.vmem [shape: f32[256,16], index: 2, kind: input, shape index: {}]
  %s3 = inlined_call_operand.vmem [shape: f32[16,16], index: 3, kind: input, shape index: {}]
  %s4 = inlined_call_operand.vmem [shape: f32[16,16], index: 4, kind: input, shape index: {}]
  %s5 = inlined_call_operand.vmem [shape: f32[16,1], index: 5, kind: input, shape index: {}]
  %s6 = inlined_call_operand.vmem [shape: f32[8,16], index: 6, kind: input, shape index: {}]
  %s7 = inlined_call_operand.vmem [shape: f32[8,1], index: 7, kind: input, shape index: {}]
  %s8 = inlined_call_operand.vmem [shape: f32[1,8], index: 8, kind: input, shape index: {}]
  %s9 = inlined_call_operand.<no memory space> [shape: f32[1,1], index: 9, kind: input, shape index: {}]
  %s10 = inlined_call_operand.hbm [shape: f32[1,256], index: 10, kind: output, shape index: {}]
  %s11 = sld [smem:[#allocation0]]
  $region69: #{tpu_custom_call.1} parent=0
    _
  %s13 = ssub.s32 1, %s11
  %s14 = scalar_select 0, %s13, %s11
  %15 = sst [smem:[#allocation3]] %s0
  %v16 = vstv %s9
  %17 = vst [vmem:[#allocation4] sm:$0x1] %v16
  $region1: #{tpu_custom_call.1} parent=0
    #allocation5 [shape = 'u8[1024]{0}', space=vmem, size = 0x400, scoped, tag = 'output window, operand 0']
    #allocation6 [shape = 's32[2]{0}', space=sflag, size = 0x8, scoped, tag = 'scoped memory for tpu_custom_call.1']
    %18 = vsyncpa [#allocation6], 0
    %s19 = scalar_lea.sflag [#allocation6], 1
    %20 = vsyncpa %s19, 0
    loop: start=0, step=1, limit=4
    $region2: #{tpu_custom_call.1} parent=1 // loop_pre_header
      _
    $region3: #{tpu_custom_call.1} parent=1 // loop_header
      %s22 = sphi 0, %s26
      %p23 = scmp.ge.s32.totalorder %s22, 4
      %s32 = sphi 0, %s34
      %s35 = sphi 0, %s32
      %s36 = sphi 0, %s35
      %s52 = sphi 0, %s36
      %s58 = sphi 0, %s60
      %s61 = sphi 0, %s58
      %s62 = sphi 0, %s61
      %s78 = sphi 0, %s62
      %s82 = sphi 0, %s82
      %s84 = sphi 0, %s82
      %s85 = sphi 0, %s84
      %s99 = sphi 0, %s85
      %s103 = sphi 0, %s103
      %s105 = sphi 0, %s103
      %s106 = sphi 0, %s105
      %s120 = sphi 0, %s106
      %s124 = sphi 0, %s124
      %s126 = sphi 0, %s124
      %s127 = sphi 0, %s126
      %s141 = sphi 0, %s127
      %s145 = sphi 0, %s145
      %s147 = sphi 0, %s145
      %s148 = sphi 0, %s147
      %s162 = sphi 0, %s148
      %s166 = sphi 0, %s166
      %s168 = sphi 0, %s166
      %s169 = sphi 0, %s168
      %s183 = sphi 0, %s169
      %s187 = sphi 0, %s187
      %s189 = sphi 0, %s187
      %s190 = sphi 0, %s189
      %s204 = sphi 0, %s190
      %s208 = sphi 0, %s208
      %s210 = sphi 0, %s208
      %s211 = sphi 0, %s210
      %s225 = sphi 0, %s211
      %s231 = sphi 0, %s233
      %s234 = sphi 0, %s231
      %s235 = sphi 0, %s234
      %s251 = sphi 0, %s235
    $region4: #{tpu_custom_call.1} parent=1 // loop_header_branch
      %25 = sbr.rel (%p23) target = $region8
    $region5: #{tpu_custom_call.1} parent=1 // loop_body
      %s27 = ssub.s32 %s22, 1
      %s28 = ssub.s32 %s22, 2
      %s29 = sadd.s32 %s22, 1
      %s30 = ssub.s32 %s22, %s29
      %p31 = scmp.eq.s32.totalorder %s30, 0
      %s33 = sadd.s32 %s32, 1
      %s34 = scalar_select %p31, %s32, %s33
      %p37 = pneg %p31
      %p38 = scmp.eq.s32.totalorder %s22, 1
      %p39 = por %p37, %p38
      %p40 = scmp.ne.s32.totalorder %s32, %s35
      %p41 = scmp.eq.s32.totalorder %s22, 0
      %p42 = por %p40, %p41
      %p43 = scmp.ne.s32.totalorder %s32, %s35
      %p44 = scmp.eq.s32.totalorder %s27, 1
      %p45 = por %p43, %p44
      %p46 = scmp.ne.s32.totalorder %s35, %s36
      %p47 = scmp.eq.s32.totalorder %s27, 0
      %p48 = por %p46, %p47
      %p49 = scmp.ne.s32.totalorder %s35, %s36
      %p50 = scmp.eq.s32.totalorder %s28, 1
      %p51 = por %p49, %p50
      %p53 = scmp.ne.s32.totalorder %s36, %s52
      %p54 = scmp.eq.s32.totalorder %s28, 0
      %p55 = por %p53, %p54
      %s56 = ssub.s32 %s22, %s29
      %p57 = scmp.eq.s32.totalorder %s56, 0
      %s59 = sadd.s32 %s58, 1
      %s60 = scalar_select %p57, %s58, %s59
      %p63 = pneg %p57
      %p64 = scmp.eq.s32.totalorder %s22, 1
      %p65 = por %p63, %p64
      %p66 = scmp.ne.s32.totalorder %s58, %s61
      %p67 = scmp.eq.s32.totalorder %s22, 0
      %p68 = por %p66, %p67
      %p69 = scmp.ne.s32.totalorder %s58, %s61
      %p70 = scmp.eq.s32.totalorder %s27, 1
      %p71 = por %p69, %p70
      %p72 = scmp.ne.s32.totalorder %s61, %s62
      %p73 = scmp.eq.s32.totalorder %s27, 0
      %p74 = por %p72, %p73
      %p75 = scmp.ne.s32.totalorder %s61, %s62
      %p76 = scmp.eq.s32.totalorder %s28, 1
      %p77 = por %p75, %p76
      %p79 = scmp.ne.s32.totalorder %s62, %s78
      %p80 = scmp.eq.s32.totalorder %s28, 0
      %p81 = por %p79, %p80
      %s83 = sadd.s32 %s82, 1
      %p86 = scmp.eq.s32.totalorder %s22, 1
      %p87 = scmp.ne.s32.totalorder %s82, %s84
      %p88 = scmp.eq.s32.totalorder %s22, 0
      %p89 = por %p87, %p88
      %p90 = scmp.ne.s32.totalorder %s82, %s84
      %p91 = scmp.eq.s32.totalorder %s27, 1
      %p92 = por %p90, %p91
      %p93 = scmp.ne.s32.totalorder %s84, %s85
      %p94 = scmp.eq.s32.totalorder %s27, 0
      %p95 = por %p93, %p94
      %p96 = scmp.ne.s32.totalorder %s84, %s85
      %p97 = scmp.eq.s32.totalorder %s28, 1
      %p98 = por %p96, %p97
      %p100 = scmp.ne.s32.totalorder %s85, %s99
      %p101 = scmp.eq.s32.totalorder %s28, 0
      %p102 = por %p100, %p101
      %s104 = sadd.s32 %s103, 1
      %p107 = scmp.eq.s32.totalorder %s22, 1
      %p108 = scmp.ne.s32.totalorder %s103, %s105
      %p109 = scmp.eq.s32.totalorder %s22, 0
      %p110 = por %p108, %p109
      %p111 = scmp.ne.s32.totalorder %s103, %s105
      %p112 = scmp.eq.s32.totalorder %s27, 1
      %p113 = por %p111, %p112
      %p114 = scmp.ne.s32.totalorder %s105, %s106
      %p115 = scmp.eq.s32.totalorder %s27, 0
      %p116 = por %p114, %p115
      %p117 = scmp.ne.s32.totalorder %s105, %s106
      %p118 = scmp.eq.s32.totalorder %s28, 1
      %p119 = por %p117, %p118
      %p121 = scmp.ne.s32.totalorder %s106, %s120
      %p122 = scmp.eq.s32.totalorder %s28, 0
      %p123 = por %p121, %p122
      %s125 = sadd.s32 %s124, 1
      %p128 = scmp.eq.s32.totalorder %s22, 1
      %p129 = scmp.ne.s32.totalorder %s124, %s126
      %p130 = scmp.eq.s32.totalorder %s22, 0
      %p131 = por %p129, %p130
      %p132 = scmp.ne.s32.totalorder %s124, %s126
      %p133 = scmp.eq.s32.totalorder %s27, 1
      %p134 = por %p132, %p133
      %p135 = scmp.ne.s32.totalorder %s126, %s127
      %p136 = scmp.eq.s32.totalorder %s27, 0
      %p137 = por %p135, %p136
      %p138 = scmp.ne.s32.totalorder %s126, %s127
      %p139 = scmp.eq.s32.totalorder %s28, 1
      %p140 = por %p138, %p139
      %p142 = scmp.ne.s32.totalorder %s127, %s141
      %p143 = scmp.eq.s32.totalorder %s28, 0
      %p144 = por %p142, %p143
      %s146 = sadd.s32 %s145, 1
      %p149 = scmp.eq.s32.totalorder %s22, 1
      %p150 = scmp.ne.s32.totalorder %s145, %s147
      %p151 = scmp.eq.s32.totalorder %s22, 0
      %p152 = por %p150, %p151
      %p153 = scmp.ne.s32.totalorder %s145, %s147
      %p154 = scmp.eq.s32.totalorder %s27, 1
      %p155 = por %p153, %p154
      %p156 = scmp.ne.s32.totalorder %s147, %s148
      %p157 = scmp.eq.s32.totalorder %s27, 0
      %p158 = por %p156, %p157
      %p159 = scmp.ne.s32.totalorder %s147, %s148
      %p160 = scmp.eq.s32.totalorder %s28, 1
      %p161 = por %p159, %p160
      %p163 = scmp.ne.s32.totalorder %s148, %s162
      %p164 = scmp.eq.s32.totalorder %s28, 0
      %p165 = por %p163, %p164
      %s167 = sadd.s32 %s166, 1
      %p170 = scmp.eq.s32.totalorder %s22, 1
      %p171 = scmp.ne.s32.totalorder %s166, %s168
      %p172 = scmp.eq.s32.totalorder %s22, 0
      %p173 = por %p171, %p172
      %p174 = scmp.ne.s32.totalorder %s166, %s168
      %p175 = scmp.eq.s32.totalorder %s27, 1
      %p176 = por %p174, %p175
      %p177 = scmp.ne.s32.totalorder %s168, %s169
      %p178 = scmp.eq.s32.totalorder %s27, 0
      %p179 = por %p177, %p178
      %p180 = scmp.ne.s32.totalorder %s168, %s169
      %p181 = scmp.eq.s32.totalorder %s28, 1
      %p182 = por %p180, %p181
      %p184 = scmp.ne.s32.totalorder %s169, %s183
      %p185 = scmp.eq.s32.totalorder %s28, 0
      %p186 = por %p184, %p185
      %s188 = sadd.s32 %s187, 1
      %p191 = scmp.eq.s32.totalorder %s22, 1
      %p192 = scmp.ne.s32.totalorder %s187, %s189
      %p193 = scmp.eq.s32.totalorder %s22, 0
      %p194 = por %p192, %p193
      %p195 = scmp.ne.s32.totalorder %s187, %s189
      %p196 = scmp.eq.s32.totalorder %s27, 1
      %p197 = por %p195, %p196
      %p198 = scmp.ne.s32.totalorder %s189, %s190
      %p199 = scmp.eq.s32.totalorder %s27, 0
      %p200 = por %p198, %p199
      %p201 = scmp.ne.s32.totalorder %s189, %s190
      %p202 = scmp.eq.s32.totalorder %s28, 1
      %p203 = por %p201, %p202
      %p205 = scmp.ne.s32.totalorder %s190, %s204
      %p206 = scmp.eq.s32.totalorder %s28, 0
      %p207 = por %p205, %p206
      %s209 = sadd.s32 %s208, 1
      %p212 = scmp.eq.s32.totalorder %s22, 1
      %p213 = scmp.ne.s32.totalorder %s208, %s210
      %p214 = scmp.eq.s32.totalorder %s22, 0
      %p215 = por %p213, %p214
      %p216 = scmp.ne.s32.totalorder %s208, %s210
      %p217 = scmp.eq.s32.totalorder %s27, 1
      %p218 = por %p216, %p217
      %p219 = scmp.ne.s32.totalorder %s210, %s211
      %p220 = scmp.eq.s32.totalorder %s27, 0
      %p221 = por %p219, %p220
      %p222 = scmp.ne.s32.totalorder %s210, %s211
      %p223 = scmp.eq.s32.totalorder %s28, 1
      %p224 = por %p222, %p223
      %p226 = scmp.ne.s32.totalorder %s211, %s225
      %p227 = scmp.eq.s32.totalorder %s28, 0
      %p228 = por %p226, %p227
      %s229 = ssub.s32 %s22, %s29
      %p230 = scmp.eq.s32.totalorder %s229, 0
      %s232 = sadd.s32 %s231, 1
      %s233 = scalar_select %p230, %s231, %s232
      %p236 = pneg %p230
      %p237 = scmp.eq.s32.totalorder %s22, 1
      %p238 = por %p236, %p237
      %p239 = scmp.ne.s32.totalorder %s231, %s234
      %p240 = scmp.eq.s32.totalorder %s22, 0
      %p241 = por %p239, %p240
      %p242 = scmp.ne.s32.totalorder %s231, %s234
      %p243 = scmp.eq.s32.totalorder %s27, 1
      %p244 = por %p242, %p243
      %p245 = scmp.ne.s32.totalorder %s234, %s235
      %p246 = scmp.eq.s32.totalorder %s27, 0
      %p247 = por %p245, %p246
      %p248 = scmp.ne.s32.totalorder %s234, %s235
      %p249 = scmp.eq.s32.totalorder %s28, 1
      %p250 = por %p248, %p249
      %p252 = scmp.ne.s32.totalorder %s235, %s251
      %p253 = scmp.eq.s32.totalorder %s28, 0
      %p254 = por %p252, %p253
      %p255 = scmp.le.s32.totalorder 1, %s22
      %p256 = scmp.lt.s32.totalorder %s22, 3
      %p257 = pnand %p255, %p256
      %p258 = pneg %p257
      // Predicated region
      $region9: #{tpu_custom_call.1} parent=5 // pred_check
        _
      $region10: #{tpu_custom_call.1} parent=5 // pred_check_branch
        %260 = sbr.rel (%p257) target = $region12
      $region11: #{tpu_custom_call.1} parent=5 // pred_region
        %s261 = ssub.s32 %s22, 1
        // Predicated region
        $region13: #{tpu_custom_call.1} parent=11 // pred_check
          %p262 = pneg %p95
        $region14: #{tpu_custom_call.1} parent=11 // pred_check_branch
          %264 = sbr.rel (%p262) target = $region16
        $region15: #{tpu_custom_call.1} parent=11 // pred_region
          _
        $region16: #{tpu_custom_call.1} parent=11 // pred_fallthru
          _
        // Predicated region
        $region17: #{tpu_custom_call.1} parent=11 // pred_check
          %p265 = pneg %p116
        $region18: #{tpu_custom_call.1} parent=11 // pred_check_branch
          %267 = sbr.rel (%p265) target = $region20
        $region19: #{tpu_custom_call.1} parent=11 // pred_region
          _
        $region20: #{tpu_custom_call.1} parent=11 // pred_fallthru
          _
        // Predicated region
        $region21: #{tpu_custom_call.1} parent=11 // pred_check
          %p268 = pneg %p137
        $region22: #{tpu_custom_call.1} parent=11 // pred_check_branch
          %270 = sbr.rel (%p268) target = $region24
        $region23: #{tpu_custom_call.1} parent=11 // pred_region
          _
        $region24: #{tpu_custom_call.1} parent=11 // pred_fallthru
          _
        // Predicated region
        $region25: #{tpu_custom_call.1} parent=11 // pred_check
          %p271 = pneg %p158
        $region26: #{tpu_custom_call.1} parent=11 // pred_check_branch
          %273 = sbr.rel (%p271) target = $region28
        $region27: #{tpu_custom_call.1} parent=11 // pred_region
          _
        $region28: #{tpu_custom_call.1} parent=11 // pred_fallthru
          _
        // Predicated region
        $region29: #{tpu_custom_call.1} parent=11 // pred_check
          %p274 = pneg %p179
        $region30: #{tpu_custom_call.1} parent=11 // pred_check_branch
          %276 = sbr.rel (%p274) target = $region32
        $region31: #{tpu_custom_call.1} parent=11 // pred_region
          _
        $region32: #{tpu_custom_call.1} parent=11 // pred_fallthru
          _
        // Predicated region
        $region33: #{tpu_custom_call.1} parent=11 // pred_check
          %p277 = pneg %p200
        $region34: #{tpu_custom_call.1} parent=11 // pred_check_branch
          %279 = sbr.rel (%p277) target = $region36
        $region35: #{tpu_custom_call.1} parent=11 // pred_region
          _
        $region36: #{tpu_custom_call.1} parent=11 // pred_fallthru
          _
        // Predicated region
        $region37: #{tpu_custom_call.1} parent=11 // pred_check
          %p280 = pneg %p221
        $region38: #{tpu_custom_call.1} parent=11 // pred_check_branch
          %282 = sbr.rel (%p280) target = $region40
        $region39: #{tpu_custom_call.1} parent=11 // pred_region
          _
        $region40: #{tpu_custom_call.1} parent=11 // pred_fallthru
          _
      $region12: #{tpu_custom_call.1} parent=5 // pred_fallthru
        _
      %p283 = scmp.lt.s32.totalorder %s22, 2
      // Predicated region
      $region41: #{tpu_custom_call.1} parent=5 // pred_check
        %p284 = pneg %p283
      $region42: #{tpu_custom_call.1} parent=5 // pred_check_branch
        %286 = sbr.rel (%p284) target = $region44
      $region43: #{tpu_custom_call.1} parent=5 // pred_region
        // Predicated region
        $region45: #{tpu_custom_call.1} parent=43 // pred_check
          %p287 = pneg %p42
        $region46: #{tpu_custom_call.1} parent=43 // pred_check_branch
          %289 = sbr.rel (%p287) target = $region48
        $region47: #{tpu_custom_call.1} parent=43 // pred_region
          %s290 = smul.u32 16, %s22
          %p291 = scmp.lt.s32.totalorder %s290, 31
          %s292 = scalar_select %p291, %s290, 31
          %s293 = smul.addr %s292, 8
          %s294 = scalar_lea.vmem %s1, %s293
          %s295 = smul.u32 16, %s22
        $region48: #{tpu_custom_call.1} parent=43 // pred_fallthru
          _
        // Predicated region
        $region49: #{tpu_custom_call.1} parent=43 // pred_check
          %p296 = pneg %p68
        $region50: #{tpu_custom_call.1} parent=43 // pred_check_branch
          %298 = sbr.rel (%p296) target = $region52
        $region51: #{tpu_custom_call.1} parent=43 // pred_region
          %s299 = smul.u32 16, %s22
          %p300 = scmp.lt.s32.totalorder %s299, 31
          %s301 = scalar_select %p300, %s299, 31
          %s302 = smul.addr %s301, 8
          %s303 = scalar_lea.vmem %s2, %s302
          %s304 = smul.u32 16, %s22
        $region52: #{tpu_custom_call.1} parent=43 // pred_fallthru
          _
      $region44: #{tpu_custom_call.1} parent=5 // pred_fallthru
        _
      %p305 = scmp.le.s32.totalorder 1, %s22
      %p306 = scmp.lt.s32.totalorder %s22, 3
      %p307 = pnand %p305, %p306
      %p308 = pneg %p307
      // Predicated region
      $region53: #{tpu_custom_call.1} parent=5 // pred_check
        _
      $region54: #{tpu_custom_call.1} parent=5 // pred_check_branch
        %310 = sbr.rel (%p307) target = $region56
      $region55: #{tpu_custom_call.1} parent=5 // pred_region
        %s311 = ssub.s32 %s22, 1
        %s312 = smul.u32 16, %s27
        %p313 = scmp.lt.s32.totalorder %s312, 31
        %s314 = scalar_select %p313, %s312, 31
        %s315 = smul.addr %s314, 8
        %s316 = scalar_lea.vmem %s1, %s315
        %p317 = pneg %p48
        %p318 = pneg %p45
        %s319 = smul.u32 16, %s27
        %p320 = scmp.lt.s32.totalorder %s319, 31
        %s321 = scalar_select %p320, %s319, 31
        %s322 = smul.addr %s321, 8
        %s323 = scalar_lea.vmem %s2, %s322
        %p324 = pneg %p74
        %p325 = pneg %p71
        %p326 = pneg %p95
        %p327 = pneg %p92
        %p328 = pneg %p116
        %p329 = pneg %p113
        %p330 = pneg %p137
        %p331 = pneg %p134
        %p332 = pneg %p158
        %p333 = pneg %p155
        %p334 = pneg %p179
        %p335 = pneg %p176
        %p336 = pneg %p200
        %p337 = pneg %p197
        %p338 = pneg %p221
        %p339 = pneg %p218
        %p340 = pneg %p247
        %p341 = pneg %p244
        %s342 = sand.u32 %s234, 1
        %s343 = scalar_lea.sflag [#allocation6], %s342
        %s344 = sand.u32 %s234, 1
        %s345 = scalar_lea.vmem [#allocation5], %s344
        %s346 = smul.u32 16, %s27
        %p347 = scmp.lt.s32.totalorder %s346, 31
        %s348 = scalar_select %p347, %s346, 31
        %s349 = smul.addr %s348, 8
        %s350 = scalar_lea.vmem %s1, %s349
        %s351 = smul.u32 16, %s27
        %s352 = smul.u32 16, %s27
        %p353 = scmp.lt.s32.totalorder %s352, 31
        %s354 = scalar_select %p353, %s352, 31
        %s355 = smul.addr %s354, 8
        %s356 = scalar_lea.vmem %s2, %s355
        %s357 = smul.u32 16, %s27
        %v358 = vld [vmem:[%s3] sm:$0xff]
        %v359 = vld [vmem:[%s3 + $0x8] sm:$0xff]
        %v360 = vld [vmem:[%s350] sm:$0xff]
        %v361 = vld [vmem:[%s350 + $0x8] sm:$0xff]
        %v362 = vld [vmem:[%s350 + $0x10] sm:$0xff]
        %v363 = vld [vmem:[%s350 + $0x18] sm:$0xff]
        %v364 = vld [vmem:[%s350 + $0x20] sm:$0xff]
        %v365 = vld [vmem:[%s350 + $0x28] sm:$0xff]
        %v366 = vld [vmem:[%s350 + $0x30] sm:$0xff]
        %v367 = vld [vmem:[%s350 + $0x38] sm:$0xff]
        %v368 = vld [vmem:[%s350 + $0x40] sm:$0xff]
        %v369 = vld [vmem:[%s350 + $0x48] sm:$0xff]
        %v370 = vld [vmem:[%s350 + $0x50] sm:$0xff]
        %v371 = vld [vmem:[%s350 + $0x58] sm:$0xff]
        %v372 = vld [vmem:[%s350 + $0x60] sm:$0xff]
        %v373 = vld [vmem:[%s350 + $0x68] sm:$0xff]
        %v374 = vld [vmem:[%s350 + $0x70] sm:$0xff]
        %v375 = vld [vmem:[%s350 + $0x78] sm:$0xff]
        %v376 = vld [vmem:[%s4] sm:$0xff]
        %v377 = vld [vmem:[%s4 + $0x8] sm:$0xff]
        %v378 = vld [vmem:[%s356] sm:$0xff]
        %v379 = vld [vmem:[%s356 + $0x8] sm:$0xff]
        %v380 = vld [vmem:[%s356 + $0x10] sm:$0xff]
        %v381 = vld [vmem:[%s356 + $0x18] sm:$0xff]
        %v382 = vld [vmem:[%s356 + $0x20] sm:$0xff]
        %v383 = vld [vmem:[%s356 + $0x28] sm:$0xff]
        %v384 = vld [vmem:[%s356 + $0x30] sm:$0xff]
        %v385 = vld [vmem:[%s356 + $0x38] sm:$0xff]
        %v386 = vld [vmem:[%s356 + $0x40] sm:$0xff]
        %v387 = vld [vmem:[%s356 + $0x48] sm:$0xff]
        %v388 = vld [vmem:[%s356 + $0x50] sm:$0xff]
        %v389 = vld [vmem:[%s356 + $0x58] sm:$0xff]
        %v390 = vld [vmem:[%s356 + $0x60] sm:$0xff]
        %v391 = vld [vmem:[%s356 + $0x68] sm:$0xff]
        %v392 = vld [vmem:[%s356 + $0x70] sm:$0xff]
        %v393 = vld [vmem:[%s356 + $0x78] sm:$0xff]
        %vm394 = vcmask 130048
        %v396 = vsel %vm394, %v376, 0
        %v399 = vsel %vm394, %v377, 0
        %v402 = vsel %vm394, %v378, 0
        %v405 = vsel %vm394, %v379, 0
        %v408 = vsel %vm394, %v380, 0
        %v411 = vsel %vm394, %v381, 0
        %v414 = vsel %vm394, %v382, 0
        %v417 = vsel %vm394, %v383, 0
        %v420 = vsel %vm394, %v384, 0
        %v423 = vsel %vm394, %v385, 0
        %v426 = vsel %vm394, %v386, 0
        %v429 = vsel %vm394, %v387, 0
        %v432 = vsel %vm394, %v388, 0
        %v435 = vsel %vm394, %v389, 0
        %v438 = vsel %vm394, %v390, 0
        %v441 = vsel %vm394, %v391, 0
        %v444 = vsel %vm394, %v392, 0
        %v447 = vsel %vm394, %v393, 0
        %449 = vmatprep.subr.mxu0 0.0
        %450 = vmatpush1.xpose.msra.mxu0 %v447
        %451 = vmatprep.subr.mxu0 0.0
        %452 = vmatpush1.xpose.msra.mxu0 %v444
        %453 = vmatprep.subr.mxu0 0.0
        %454 = vmatpush1.xpose.msra.mxu0 %v441
        %455 = vmatprep.subr.mxu0 0.0
        %456 = vmatpush1.xpose.msra.mxu0 %v438
        %457 = vmatprep.subr.mxu0 0.0
        %458 = vmatpush1.xpose.msra.mxu0 %v435
        %459 = vmatprep.subr.mxu0 0.0
        %460 = vmatpush1.xpose.msra.mxu0 %v432
        %461 = vmatprep.subr.mxu0 0.0
        %462 = vmatpush1.xpose.msra.mxu0 %v429
        %463 = vmatprep.subr.mxu0 0.0
        %464 = vmatpush1.xpose.msra.mxu0 %v426
        %465 = vmatprep.subr.mxu0 0.0
        %466 = vmatpush1.xpose.msra.mxu0 %v423
        %467 = vmatprep.subr.mxu0 0.0
        %468 = vmatpush1.xpose.msra.mxu0 %v420
        %469 = vmatprep.subr.mxu0 0.0
        %470 = vmatpush1.xpose.msra.mxu0 %v417
        %471 = vmatprep.subr.mxu0 0.0
        %472 = vmatpush1.xpose.msra.mxu0 %v414
        %473 = vmatprep.subr.mxu0 0.0
        %474 = vmatpush1.xpose.msra.mxu0 %v411
        %475 = vmatprep.subr.mxu0 0.0
        %476 = vmatpush1.xpose.msra.mxu0 %v408
        %477 = vmatprep.subr.mxu0 0.0
        %478 = vmatpush1.xpose.msra.mxu0 %v405
        %479 = vmatprep.subr.mxu0 0.0
        %480 = vmatpush1.xpose.msra.mxu0 %v402
        %481 = vmatprep.subr.mxu0 0.0
        %482 = vmatpush2.xpose.msra.mxu0 0.0
        %483 = vmatprep.subr.mxu0 0.0
        %484 = vmatpush2.xpose.msra.mxu0 0.0
        %485 = vmatprep.subr.mxu0 0.0
        %486 = vmatpush2.xpose.msra.mxu0 0.0
        %487 = vmatprep.subr.mxu0 0.0
        %488 = vmatpush2.xpose.msra.mxu0 0.0
        %489 = vmatprep.subr.mxu0 0.0
        %490 = vmatpush2.xpose.msra.mxu0 0.0
        %491 = vmatprep.subr.mxu0 0.0
        %492 = vmatpush2.xpose.msra.mxu0 0.0
        %493 = vmatprep.subr.mxu0 0.0
        %494 = vmatpush2.xpose.msra.mxu0 0.0
        %495 = vmatprep.subr.mxu0 0.0
        %496 = vmatpush2.xpose.msra.mxu0 0.0
        %497 = vmatprep.subr.mxu0 0.0
        %498 = vmatpush2.xpose.msra.mxu0 0.0
        %499 = vmatprep.subr.mxu0 0.0
        %500 = vmatpush2.xpose.msra.mxu0 0.0
        %501 = vmatprep.subr.mxu0 0.0
        %502 = vmatpush2.xpose.msra.mxu0 0.0
        %503 = vmatprep.subr.mxu0 0.0
        %504 = vmatpush2.xpose.msra.mxu0 0.0
        %505 = vmatprep.subr.mxu0 0.0
        %506 = vmatpush2.xpose.msra.mxu0 0.0
        %507 = vmatprep.subr.mxu0 0.0
        %508 = vmatpush2.xpose.msra.mxu0 0.0
        %509 = vmatprep.subr.mxu0 0.0
        %510 = vmatpush2.xpose.msra.mxu0 0.0
        %511 = vmatprep.subr.mxu0 0.0
        %512 = vmatpush2.xpose.msra.mxu0 0.0
        %513 = vmatprep.mubr.f32.mxu0 0.0
        %514 = vmatmul.mubr.f32.gmra.mxu0 %v396
        %v515 = vpop.f32.mrf.mxu0
        %v516 = vadd.f32 0.0, %v515
        %v517 = vpop.f32.mrf.mxu0
        %518 = vmatprep.mubr.f32.mxu0 0.0
        %519 = vmatmul.mubr.f32.gmra.mxu0 %v399
        %v520 = vpop.f32.mrf.mxu0
        %v521 = vadd.f32 0.0, %v520
        %v522 = vpop.f32.mrf.mxu0
        %523 = vdwg.mxu0
        %v525 = vsel %vm394, %v358, 0
        %v528 = vsel %vm394, %v359, 0
        %v531 = vsel %vm394, %v360, 0
        %v534 = vsel %vm394, %v361, 0
        %v537 = vsel %vm394, %v362, 0
        %v540 = vsel %vm394, %v363, 0
        %v543 = vsel %vm394, %v364, 0
        %v546 = vsel %vm394, %v365, 0
        %v549 = vsel %vm394, %v366, 0
        %v552 = vsel %vm394, %v367, 0
        %v555 = vsel %vm394, %v368, 0
        %v558 = vsel %vm394, %v369, 0
        %v561 = vsel %vm394, %v370, 0
        %v564 = vsel %vm394, %v371, 0
        %v567 = vsel %vm394, %v372, 0
        %v570 = vsel %vm394, %v373, 0
        %v573 = vsel %vm394, %v374, 0
        %v576 = vsel %vm394, %v375, 0
        %578 = vmatprep.subr.mxu0 0.0
        %579 = vmatpush1.xpose.msra.mxu0 %v576
        %580 = vmatprep.subr.mxu0 0.0
        %581 = vmatpush1.xpose.msra.mxu0 %v573
        %582 = vmatprep.subr.mxu0 0.0
        %583 = vmatpush1.xpose.msra.mxu0 %v570
        %584 = vmatprep.subr.mxu0 0.0
        %585 = vmatpush1.xpose.msra.mxu0 %v567
        %586 = vmatprep.subr.mxu0 0.0
        %587 = vmatpush1.xpose.msra.mxu0 %v564
        %588 = vmatprep.subr.mxu0 0.0
        %589 = vmatpush1.xpose.msra.mxu0 %v561
        %590 = vmatprep.subr.mxu0 0.0
        %591 = vmatpush1.xpose.msra.mxu0 %v558
        %592 = vmatprep.subr.mxu0 0.0
        %593 = vmatpush1.xpose.msra.mxu0 %v555
        %594 = vmatprep.subr.mxu0 0.0
        %595 = vmatpush1.xpose.msra.mxu0 %v552
        %596 = vmatprep.subr.mxu0 0.0
        %597 = vmatpush1.xpose.msra.mxu0 %v549
        %598 = vmatprep.subr.mxu0 0.0
        %599 = vmatpush1.xpose.msra.mxu0 %v546
        %600 = vmatprep.subr.mxu0 0.0
        %601 = vmatpush1.xpose.msra.mxu0 %v543
        %602 = vmatprep.subr.mxu0 0.0
        %603 = vmatpush1.xpose.msra.mxu0 %v540
        %604 = vmatprep.subr.mxu0 0.0
        %605 = vmatpush1.xpose.msra.mxu0 %v537
        %606 = vmatprep.subr.mxu0 0.0
        %607 = vmatpush1.xpose.msra.mxu0 %v534
        %608 = vmatprep.subr.mxu0 0.0
        %609 = vmatpush1.xpose.msra.mxu0 %v531
        %610 = vmatprep.subr.mxu0 0.0
        %611 = vmatpush2.xpose.msra.mxu0 0.0
        %612 = vmatprep.subr.mxu0 0.0
        %613 = vmatpush2.xpose.msra.mxu0 0.0
        %614 = vmatprep.subr.mxu0 0.0
        %615 = vmatpush2.xpose.msra.mxu0 0.0
        %616 = vmatprep.subr.mxu0 0.0
        %617 = vmatpush2.xpose.msra.mxu0 0.0
        %618 = vmatprep.subr.mxu0 0.0
        %619 = vmatpush2.xpose.msra.mxu0 0.0
        %620 = vmatprep.subr.mxu0 0.0
        %621 = vmatpush2.xpose.msra.mxu0 0.0
        %622 = vmatprep.subr.mxu0 0.0
        %623 = vmatpush2.xpose.msra.mxu0 0.0
        %624 = vmatprep.subr.mxu0 0.0
        %625 = vmatpush2.xpose.msra.mxu0 0.0
        %626 = vmatprep.subr.mxu0 0.0
        %627 = vmatpush2.xpose.msra.mxu0 0.0
        %628 = vmatprep.subr.mxu0 0.0
        %629 = vmatpush2.xpose.msra.mxu0 0.0
        %630 = vmatprep.subr.mxu0 0.0
        %631 = vmatpush2.xpose.msra.mxu0 0.0
        %632 = vmatprep.subr.mxu0 0.0
        %633 = vmatpush2.xpose.msra.mxu0 0.0
        %634 = vmatprep.subr.mxu0 0.0
        %635 = vmatpush2.xpose.msra.mxu0 0.0
        %636 = vmatprep.subr.mxu0 0.0
        %637 = vmatpush2.xpose.msra.mxu0 0.0
        %638 = vmatprep.subr.mxu0 0.0
        %639 = vmatpush2.xpose.msra.mxu0 0.0
        %640 = vmatprep.subr.mxu0 0.0
        %641 = vmatpush2.xpose.msra.mxu0 0.0
        %642 = vmatprep.mubr.f32.mxu0 0.0
        %643 = vmatmul.mubr.f32.gmra.mxu0 %v525
        %v644 = vpop.f32.mrf.mxu0
        %v645 = vadd.f32 %v516, %v644
        %v646 = vpop.f32.mrf.mxu0
        %647 = vmatprep.mubr.f32.mxu0 0.0
        %648 = vmatmul.mubr.f32.gmra.mxu0 %v528
        %v649 = vpop.f32.mrf.mxu0
        %v650 = vadd.f32 %v521, %v649
        %v651 = vpop.f32.mrf.mxu0
        %652 = vdwg.mxu0
        %v653 = vld [vmem:[%s5] sm:$0xff]
        %v654 = vld [vmem:[%s5 + $0x8] sm:$0xff]
        %656 = vset.pattern.permute.xlu0 0
        %657 = vperm.xlu0 %656, %v653
        %v658 = vpop.permute.xlu0 %657
        %661 = vset.pattern.permute.xlu0 0
        %662 = vperm.xlu0 %661, %v654
        %v663 = vpop.permute.xlu0 %662
        %v665 = vadd.f32 %v645, %v658
        %v666 = vadd.f32 %v650, %v663
        %v667 = vmax.f32 %v665, 0.0
        %v668 = vmax.f32 %v666, 0.0
        %v669 = vld [vmem:[%s6] sm:$0xff]
        %v670 = vld [vmem:[%s7] sm:$0xff]
        %672 = vset.pattern.permute.xlu0 0
        %673 = vperm.xlu0 %672, %v670
        %v674 = vpop.permute.xlu0 %673
        %v677 = vsel %vm394, %v669, 0
        %679 = vmatprep.subr.mxu0 0.0
        %680 = vmatpush1.msra.mxu0 0.0
        %681 = vmatprep.subr.mxu0 0.0
        %682 = vmatpush1.msra.mxu0 0.0
        %683 = vmatprep.subr.mxu0 0.0
        %684 = vmatpush1.msra.mxu0 0.0
        %685 = vmatprep.subr.mxu0 0.0
        %686 = vmatpush1.msra.mxu0 0.0
        %687 = vmatprep.subr.mxu0 0.0
        %688 = vmatpush1.msra.mxu0 0.0
        %689 = vmatprep.subr.mxu0 0.0
        %690 = vmatpush1.msra.mxu0 0.0
        %691 = vmatprep.subr.mxu0 0.0
        %692 = vmatpush1.msra.mxu0 0.0
        %693 = vmatprep.subr.mxu0 0.0
        %694 = vmatpush1.msra.mxu0 0.0
        %695 = vmatprep.subr.mxu0 0.0
        %696 = vmatpush1.msra.mxu0 0.0
        %697 = vmatprep.subr.mxu0 0.0
        %698 = vmatpush1.msra.mxu0 0.0
        %699 = vmatprep.subr.mxu0 0.0
        %700 = vmatpush1.msra.mxu0 0.0
        %701 = vmatprep.subr.mxu0 0.0
        %702 = vmatpush1.msra.mxu0 0.0
        %703 = vmatprep.subr.mxu0 0.0
        %704 = vmatpush1.msra.mxu0 0.0
        %705 = vmatprep.subr.mxu0 0.0
        %706 = vmatpush1.msra.mxu0 0.0
        %707 = vmatprep.subr.mxu0 0.0
        %708 = vmatpush1.msra.mxu0 %v668
        %709 = vmatprep.subr.mxu0 0.0
        %710 = vmatpush1.msra.mxu0 %v667
        %711 = vmatprep.subr.mxu0 0.0
        %712 = vmatpush2.msra.mxu0 0.0
        %713 = vmatprep.subr.mxu0 0.0
        %714 = vmatpush2.msra.mxu0 0.0
        %715 = vmatprep.subr.mxu0 0.0
        %716 = vmatpush2.msra.mxu0 0.0
        %717 = vmatprep.subr.mxu0 0.0
        %718 = vmatpush2.msra.mxu0 0.0
        %719 = vmatprep.subr.mxu0 0.0
        %720 = vmatpush2.msra.mxu0 0.0
        %721 = vmatprep.subr.mxu0 0.0
        %722 = vmatpush2.msra.mxu0 0.0
        %723 = vmatprep.subr.mxu0 0.0
        %724 = vmatpush2.msra.mxu0 0.0
        %725 = vmatprep.subr.mxu0 0.0
        %726 = vmatpush2.msra.mxu0 0.0
        %727 = vmatprep.subr.mxu0 0.0
        %728 = vmatpush2.msra.mxu0 0.0
        %729 = vmatprep.subr.mxu0 0.0
        %730 = vmatpush2.msra.mxu0 0.0
        %731 = vmatprep.subr.mxu0 0.0
        %732 = vmatpush2.msra.mxu0 0.0
        %733 = vmatprep.subr.mxu0 0.0
        %734 = vmatpush2.msra.mxu0 0.0
        %735 = vmatprep.subr.mxu0 0.0
        %736 = vmatpush2.msra.mxu0 0.0
        %737 = vmatprep.subr.mxu0 0.0
        %738 = vmatpush2.msra.mxu0 0.0
        %739 = vmatprep.subr.mxu0 0.0
        %740 = vmatpush2.msra.mxu0 0.0
        %741 = vmatprep.subr.mxu0 0.0
        %742 = vmatpush2.msra.mxu0 0.0
        %743 = vmatprep.mubr.f32.mxu0 0.0
        %744 = vmatmul.mubr.f32.gmra.mxu0 %v677
        %v745 = vpop.f32.mrf.mxu0
        %v746 = vadd.f32 %v674, %v745
        %v747 = vpop.f32.mrf.mxu0
        %748 = vdwg.mxu0
        %v749 = vmax.f32 %v746, 0.0
        %v750 = vld [vmem:[%s8] sm:$0x1]
        %v751 = vld [vmem:[#allocation4] sm:$0x1]
        %753 = vset.pattern.permute.xlu0 0
        %754 = vperm.xlu0 %753, %v751
        %v755 = vpop.permute.xlu0 %754
        %v757 = vlaneseq
        %v758 = vshrl.u32 %v757, 7
        %v759 = vsub.s32 0, %v758
        %v760 = vrot.slane %v755, %v759
        %vm761 = vcmask 64512
        %v763 = vsel %vm761, %v750, 0
        %765 = vmatprep.subr.mxu0 0.0
        %766 = vmatpush1.msra.mxu0 0.0
        %767 = vmatprep.subr.mxu0 0.0
        %768 = vmatpush1.msra.mxu0 0.0
        %769 = vmatprep.subr.mxu0 0.0
        %770 = vmatpush1.msra.mxu0 0.0
        %771 = vmatprep.subr.mxu0 0.0
        %772 = vmatpush1.msra.mxu0 0.0
        %773 = vmatprep.subr.mxu0 0.0
        %774 = vmatpush1.msra.mxu0 0.0
        %775 = vmatprep.subr.mxu0 0.0
        %776 = vmatpush1.msra.mxu0 0.0
        %777 = vmatprep.subr.mxu0 0.0
        %778 = vmatpush1.msra.mxu0 0.0
        %779 = vmatprep.subr.mxu0 0.0
        %780 = vmatpush1.msra.mxu0 0.0
        %781 = vmatprep.subr.mxu0 0.0
        %782 = vmatpush1.msra.mxu0 0.0
        %783 = vmatprep.subr.mxu0 0.0
        %784 = vmatpush1.msra.mxu0 0.0
        %785 = vmatprep.subr.mxu0 0.0
        %786 = vmatpush1.msra.mxu0 0.0
        %787 = vmatprep.subr.mxu0 0.0
        %788 = vmatpush1.msra.mxu0 0.0
        %789 = vmatprep.subr.mxu0 0.0
        %790 = vmatpush1.msra.mxu0 0.0
        %791 = vmatprep.subr.mxu0 0.0
        %792 = vmatpush1.msra.mxu0 0.0
        %793 = vmatprep.subr.mxu0 0.0
        %794 = vmatpush1.msra.mxu0 0.0
        %795 = vmatprep.subr.mxu0 0.0
        %796 = vmatpush1.msra.mxu0 %v749
        %797 = vmatprep.subr.mxu0 0.0
        %798 = vmatpush2.msra.mxu0 0.0
        %799 = vmatprep.subr.mxu0 0.0
        %800 = vmatpush2.msra.mxu0 0.0
        %801 = vmatprep.subr.mxu0 0.0
        %802 = vmatpush2.msra.mxu0 0.0
        %803 = vmatprep.subr.mxu0 0.0
        %804 = vmatpush2.msra.mxu0 0.0
        %805 = vmatprep.subr.mxu0 0.0
        %806 = vmatpush2.msra.mxu0 0.0
        %807 = vmatprep.subr.mxu0 0.0
        %808 = vmatpush2.msra.mxu0 0.0
        %809 = vmatprep.subr.mxu0 0.0
        %810 = vmatpush2.msra.mxu0 0.0
        %811 = vmatprep.subr.mxu0 0.0
        %812 = vmatpush2.msra.mxu0 0.0
        %813 = vmatprep.subr.mxu0 0.0
        %814 = vmatpush2.msra.mxu0 0.0
        %815 = vmatprep.subr.mxu0 0.0
        %816 = vmatpush2.msra.mxu0 0.0
        %817 = vmatprep.subr.mxu0 0.0
        %818 = vmatpush2.msra.mxu0 0.0
        %819 = vmatprep.subr.mxu0 0.0
        %820 = vmatpush2.msra.mxu0 0.0
        %821 = vmatprep.subr.mxu0 0.0
        %822 = vmatpush2.msra.mxu0 0.0
        %823 = vmatprep.subr.mxu0 0.0
        %824 = vmatpush2.msra.mxu0 0.0
        %825 = vmatprep.subr.mxu0 0.0
        %826 = vmatpush2.msra.mxu0 0.0
        %827 = vmatprep.subr.mxu0 0.0
        %828 = vmatpush2.msra.mxu0 0.0
        %829 = vmatprep.mubr.f32.mxu0 0.0
        %830 = vmatmul.mubr.f32.gmra.mxu0 %v763
        %v831 = vpop.f32.mrf.mxu0
        %v832 = vadd.f32 %v760, %v831
        %v833 = vpop.f32.mrf.mxu0
        %834 = vdwg.mxu0
        %v835 = vxor.u32 %v832, 2147483648
        %v836 = vmul.f32 %v835, 1.442695
        %v837 = vpow.pop %v836
        %v838 = vadd.f32 %v837, 1.0
        %v839 = vrcp.pop %v838
        %v840 = vmul.f32 1.0, %v839
        %841 = vst [vmem:[%s345] sm:$0x1] %v840
        %s842 = sand.u32 %s234, 1
        %s843 = scalar_lea.sflag [#allocation6], %s842
        %s844 = sand.u32 %s234, 1
        %s845 = scalar_lea.vmem [#allocation5], %s844
        // Predicated region
        $region57: #{tpu_custom_call.1} parent=55 // pred_check
          %p846 = pneg %p244
        $region58: #{tpu_custom_call.1} parent=55 // pred_check_branch
          %848 = sbr.rel (%p846) target = $region60
        $region59: #{tpu_custom_call.1} parent=55 // pred_region
          %s850 = ssub.s32 16, 16
          %851 = vsyncadd %s843, %s850
          %s852 = smul.addr %s27, 16
          %s853 = scalar_lea.hbm %s10, %s852
          %s855 = sshll.u32 %s845, 4
          %s856 = int_to_ptr.vmem [resolvable:$true] %s855
          %858 = dma.vmem_to_hbm [thread:$0]  %s856, 16, %s853, %s843
        $region60: #{tpu_custom_call.1} parent=55 // pred_fallthru
          _
      $region56: #{tpu_custom_call.1} parent=5 // pred_fallthru
        _
      %p859 = scmp.le.s32.totalorder 2, %s22
      // Predicated region
      $region61: #{tpu_custom_call.1} parent=5 // pred_check
        %p860 = pneg %p859
      $region62: #{tpu_custom_call.1} parent=5 // pred_check_branch
        %862 = sbr.rel (%p860) target = $region64
      $region63: #{tpu_custom_call.1} parent=5 // pred_region
        %s863 = ssub.s32 %s22, 2
        // Predicated region
        $region65: #{tpu_custom_call.1} parent=63 // pred_check
          %p864 = pneg %p250
        $region66: #{tpu_custom_call.1} parent=63 // pred_check_branch
          %866 = sbr.rel (%p864) target = $region68
        $region67: #{tpu_custom_call.1} parent=63 // pred_region
          %s867 = sand.u32 %s235, 1
          %s868 = scalar_lea.sflag [#allocation6], %s867
          %s869 = sand.u32 %s235, 1
          %s870 = scalar_lea.vmem [#allocation5], %s869
          %871 = dma.done %s868, 16
        $region68: #{tpu_custom_call.1} parent=63 // pred_fallthru
          _
      $region64: #{tpu_custom_call.1} parent=5 // pred_fallthru
        _
    $region6: #{tpu_custom_call.1} parent=1 // loop_footer
      %s26 = sadd.s32 1, %s22
    $region7: #{tpu_custom_call.1} parent=1 // loop_footer_branch
      %21 = sbr.rel target = $region3
    $region8: #{tpu_custom_call.1} parent=1 // loop_exit
      _
    %872 = vsyncpa [#allocation6], 1
    %s873 = scalar_lea.sflag [#allocation6], 1
    %874 = vsyncpa %s873, 1

</llo_original>
